<compile_context>
chip_gen: v5e
topology: v5e:2x2
jax: 0.10.0
libtpu: 0.0.40
codegen_flags: <defaults>
</compile_context>

<pallas_src>
import functools

import jax
import jax.numpy as jnp
from jax import lax
from jax.experimental import pallas as pl
from jax.experimental.pallas import tpu as pltpu

# Keep wrapper/reference f32 matmuls in full precision so the pure-JAX
# reference matches the in-kernel f32 MXU math.
jax.config.update("jax_default_matmul_precision", "highest")


def _iic_kernel(activate, num_classes, num_classes_over, inv_hw, with_features,
                x_ref, wc_ref, bc_ref, wh_ref, bh_ref, *rest):
    # x_ref:  (1, C, tile_s)   one spatial tile of one batch image (channels first)
    # wc_ref: (C, F)           synthetic backbone 1x1 conv weight
    # bc_ref: (1, F)           backbone bias (row)
    # wh_ref: (F, NPAD)        fused fc|fc_over weight, zero-padded to 128 lanes
    # bh_ref: (1, NPAD)        fused bias, zero-padded
    # outputs: out_ref (B, NPAD) [, feat_ref (B, F)]; scratch: acc_ref (1, F)
    if with_features:
        out_ref, feat_ref, acc_ref = rest
    else:
        out_ref, acc_ref = rest
        feat_ref = None

    b = pl.program_id(0)
    s = pl.program_id(1)
    n_s = pl.num_programs(1)

    @pl.when(s == 0)
    def _():
        acc_ref[...] = jnp.zeros_like(acc_ref)

    x = x_ref[0]  # (C, tile_s)

    # Backbone "forward_features": 1x1 conv as a matmul contracting C,
    # producing (tile_s, F) so F sits on lanes; then bias + ReLU.
    h = lax.dot_general(x, wc_ref[...],
                        dimension_numbers=(((0,), (0,)), ((), ())),
                        preferred_element_type=jnp.float32)      # (tile_s, F)
    h = jnp.maximum(h + bc_ref[...], 0.0)

    # Partial global-average-pool: sublane reduction over this spatial tile.
    acc_ref[...] += jnp.sum(h, axis=0, keepdims=True)            # (1, F)

    @pl.when(s == n_s - 1)
    def _():
        feats = acc_ref[...] * inv_hw                            # (1, F)
        if with_features:
            feat_ref[pl.ds(b, 1), :] = feats

        # Fused heads: x = fc(features), x_over = fc_over(features).
        z = jnp.dot(feats, wh_ref[...],
                    preferred_element_type=jnp.float32) + bh_ref[...]  # (1, NPAD)

        if activate:
            if num_classes > 1:
                # Per-head softmax over the real (un-padded) columns only.
                col = lax.broadcasted_iota(jnp.int32, z.shape, 1)

                def seg_softmax(lo, hi):
                    m = (col >= lo) & (col < hi)
                    zm = jnp.where(m, z, -jnp.inf)
                    zmax = jnp.max(zm, axis=-1, keepdims=True)
                    e = jnp.exp(zm - zmax)
                    ssum = jnp.sum(e, axis=-1, keepdims=True)
                    return e * pl.reciprocal(ssum, approx=True)

                z = (seg_softmax(0, num_classes) +
                     seg_softmax(num_classes, num_classes + num_classes_over))
            else:
                z = jax.nn.sigmoid(z)

        out_ref[pl.ds(b, 1), :] = z


def init_iic_params(key, in_channels, num_features, num_classes, num_classes_over):
    """Deterministic parameter init (PyTorch-Linear-style uniform)."""
    ks = jax.random.split(key, 6)

    def _lin(kw, kb, fan_in, fan_out):
        bound = 1.0 / (fan_in ** 0.5)
        w = jax.random.uniform(kw, (fan_in, fan_out), jnp.float32, -bound, bound)
        b = jax.random.uniform(kb, (1, fan_out), jnp.float32, -bound, bound)
        return w, b

    wc, bc = _lin(ks[0], ks[1], in_channels, num_features)        # backbone 1x1 conv
    wf, bf = _lin(ks[2], ks[3], num_features, num_classes)        # fc
    wo, bo = _lin(ks[4], ks[5], num_features, num_classes_over)   # fc_over
    return dict(wc=wc, bc=bc, wf=wf, bf=bf, wo=wo, bo=bo)


def _pick_tile_s(hw):
    """Largest lane-multiple tile that divides HW; prefer >=2 tiles for pipelining."""
    cands = [t for t in (512, 384, 256, 128) if hw % t == 0]
    multi = [t for t in cands if hw // t >= 2]
    if multi:
        return multi[0]
    if cands:
        return cands[0]
    return hw   # small / odd HW: single full-extent tile (block == full dim is legal)


def iic_forward(x_nchw, params, num_classes, num_classes_over,
                activate=False, with_features=False):
    B, C, H, W = x_nchw.shape
    HW = H * W
    F = params["wc"].shape[1]
    C1, C2 = num_classes, num_classes_over
    NPAD = ((C1 + C2 + 127) // 128) * 128   # lane-dense fused head width

    # NCHW -> (B, C, HW) is a pure reshape: no transpose HBM round trip.
    x3 = x_nchw.reshape(B, C, HW).astype(jnp.float32)

    # Fuse the two heads into one lane-padded weight/bias (zeros in padding).
    wh = jnp.zeros((F, NPAD), jnp.float32)
    wh = wh.at[:, :C1].set(params["wf"]).at[:, C1:C1 + C2].set(params["wo"])
    bh = jnp.zeros((1, NPAD), jnp.float32)
    bh = bh.at[:, :C1].set(params["bf"]).at[:, C1:C1 + C2].set(params["bo"])

    tile_s = _pick_tile_s(HW)
    assert HW % tile_s == 0
    n_s = HW // tile_s

    kernel = functools.partial(_iic_kernel, activate, num_classes,
                               num_classes_over, 1.0 / HW, with_features)

    out_shapes = [jax.ShapeDtypeStruct((B, NPAD), jnp.float32)]
    out_specs = [pl.BlockSpec((B, NPAD), lambda b, s: (0, 0))]
    if with_features:
        out_shapes.append(jax.ShapeDtypeStruct((B, F), jnp.float32))
        out_specs.append(pl.BlockSpec((B, F), lambda b, s: (0, 0)))

    # Working set: double-buffered x tile + resident weights/outputs/scratch.
    working = (2 * C * tile_s + C * F + F + NPAD * F + NPAD
               + B * (NPAD + F) + F) * 4
    vmem_limit = int(min(max(4 * working, 16 << 20), 32 << 20))  # fits v5e/v6e/v7x

    res = pl.pallas_call(
        kernel,
        out_shape=tuple(out_shapes),
        grid_spec=pltpu.PrefetchScalarGridSpec(
            num_scalar_prefetch=0,
            grid=(B, n_s),                      # reduction (spatial) axis last
            in_specs=[
                pl.BlockSpec((1, C, tile_s), lambda b, s: (b, 0, s)),  # x stream
                pl.BlockSpec((C, F), lambda b, s: (0, 0)),             # wc (resident)
                pl.BlockSpec((1, F), lambda b, s: (0, 0)),             # bc
                pl.BlockSpec((F, NPAD), lambda b, s: (0, 0)),          # fused head W
                pl.BlockSpec((1, NPAD), lambda b, s: (0, 0)),          # fused head b
            ],
            out_specs=tuple(out_specs),
            scratch_shapes=[pltpu.VMEM((1, F), jnp.float32)],          # pool accum
        ),
        compiler_params=pltpu.CompilerParams(
            # Outputs are full-resident blocks across the grid, so both axes
            # must be "arbitrary" (per-batch output blocks would allow
            # "parallel" on b for v7x megacore).
            dimension_semantics=("arbitrary", "arbitrary"),
            vmem_limit_bytes=vmem_limit,
        ),
    )(x3, params["wc"], params["bc"], wh, bh)

    out_full = res[0]
    logits = out_full[:, :C1]
    over = out_full[:, C1:C1 + C2]
    if with_features:
        return logits, over, res[1]
    return logits, over


def _reference(x_nchw, params, num_classes, activate):
    """Pure-JAX reference of the same forward (correctness check)."""
    B, C, H, W = x_nchw.shape
    x2d = jnp.transpose(x_nchw, (0, 2, 3, 1)).reshape(B, H * W, C).astype(jnp.float32)
    h = jnp.maximum(jnp.einsum("bsc,cf->bsf", x2d, params["wc"]) + params["bc"], 0.0)
    feats = jnp.mean(h, axis=1)
    logits = feats @ params["wf"] + params["bf"]
    over = feats @ params["wo"] + params["bo"]
    if activate:
        if num_classes > 1:
            logits = jax.nn.softmax(logits, axis=1)
            over = jax.nn.softmax(over, axis=1)
        else:
            logits = jax.nn.sigmoid(logits)
            over = jax.nn.sigmoid(over)
    return logits, over, feats


if __name__ == "__main__":
    B, C, H, W = 2, 4, 16, 16
    NUM_FEATURES = 32
    NUM_CLASSES = 5
    NUM_CLASSES_OVER = 10

    key = jax.random.PRNGKey(0)
    k_x, k_p = jax.random.split(key)
    x = jax.random.normal(k_x, (B, C, H, W), dtype=jnp.float32)
    params = init_iic_params(k_p, C, NUM_FEATURES, NUM_CLASSES, NUM_CLASSES_OVER)

    # Default forward (activate=False): raw logits.
    out, out_over = iic_forward(x, params, NUM_CLASSES, NUM_CLASSES_OVER)
    jax.block_until_ready((out, out_over))

    # activate=True, with_features=True path (masked softmax in-kernel).
    out_a, over_a, feats = iic_forward(
        x, params, NUM_CLASSES, NUM_CLASSES_OVER, activate=True, with_features=True)
    jax.block_until_ready((out_a, over_a, feats))

    # Correctness vs pure-JAX reference.
    ref_out, ref_over, ref_feats = _reference(x, params, NUM_CLASSES, activate=False)
    assert jnp.allclose(out, ref_out, atol=1e-5, rtol=1e-5)
    assert jnp.allclose(out_over, ref_over, atol=1e-5, rtol=1e-5)
    assert jnp.allclose(feats, ref_feats, atol=1e-5, rtol=1e-5)

    # Activated path compared with a looser tolerance (approx reciprocal in-kernel).
    ref_out_a, ref_over_a, _ = _reference(x, params, NUM_CLASSES, activate=True)
    assert jnp.allclose(out_a, ref_out_a, atol=2e-3, rtol=2e-3)
    assert jnp.allclose(over_a, ref_over_a, atol=2e-3, rtol=2e-3)

    print("KERNEL_OK")
</pallas_src>

<mosaic_0001>
module attributes {stable_mosaic.version = 11 : i64} {
  func.func @_iic_kernel(%arg0: i32, %arg1: i32, %arg2: memref<1x4x128xf32, #tpu.memory_space<vmem>>, %arg3: memref<4x32xf32, #tpu.memory_space<vmem>>, %arg4: memref<1x32xf32, #tpu.memory_space<vmem>>, %arg5: memref<32x128xf32, #tpu.memory_space<vmem>>, %arg6: memref<1x128xf32, #tpu.memory_space<vmem>>, %arg7: memref<2x128xf32, #tpu.memory_space<vmem>>, %arg8: memref<1x32xf32, #tpu.memory_space<vmem>>) attributes {dimension_semantics = [#tpu.dimension_semantics<arbitrary>, #tpu.dimension_semantics<arbitrary>], iteration_bounds = array<i64: 2, 2>, scalar_prefetch = 0 : i64, scratch_operands = 1 : i64, tpu.core_type = #tpu.core_type<tc>, window_params = [{transform_indices = @transform_0, window_bounds = array<i64: 1, 4, 128>}, {pipeline_mode = #tpu.pipeline_mode<synchronous>, transform_indices = @transform_1, window_bounds = array<i64: 4, 32>}, {pipeline_mode = #tpu.pipeline_mode<synchronous>, transform_indices = @transform_2, window_bounds = array<i64: 1, 32>}, {pipeline_mode = #tpu.pipeline_mode<synchronous>, transform_indices = @transform_3, window_bounds = array<i64: 32, 128>}, {pipeline_mode = #tpu.pipeline_mode<synchronous>, transform_indices = @transform_4, window_bounds = array<i64: 1, 128>}, {pipeline_mode = #tpu.pipeline_mode<synchronous>, transform_indices = @transform_5, window_bounds = array<i64: 2, 128>}]} {
    %c0_i32 = arith.constant 0 : i32
    %0 = arith.cmpi eq, %arg1, %c0_i32 : i32
    %1 = arith.extui %0 : i1 to i32
    %c0_i32_0 = arith.constant 0 : i32
    %2 = arith.cmpi ne, %1, %c0_i32_0 : i32
    scf.if %2 {
      %cst_14 = arith.constant 0.000000e+00 : f32
      %20 = vector.broadcast %cst_14 : f32 to vector<1x32xf32>
      %c0_15 = arith.constant 0 : index
      %c0_16 = arith.constant 0 : index
      %21 = vector.load %arg8[%c0_15, %c0_16] : memref<1x32xf32, #tpu.memory_space<vmem>>, vector<1x32xf32>
      tpu.vector_store %arg8[%c0_15, %c0_16], %20 {strides = array<i32>} : memref<1x32xf32, #tpu.memory_space<vmem>>, vector<1x32xf32>,
    } else {
    }
    %c0 = arith.constant 0 : index
    %c0_1 = arith.constant 0 : index
    %c0_2 = arith.constant 0 : index
    %3 = vector.load %arg2[%c0, %c0_1, %c0_2] : memref<1x4x128xf32, #tpu.memory_space<vmem>>, vector<1x4x128xf32>
    %4 = vector.shape_cast %3 : vector<1x4x128xf32> to vector<4x128xf32>
    %c0_3 = arith.constant 0 : index
    %c0_4 = arith.constant 0 : index
    %5 = vector.load %arg3[%c0_3, %c0_4] : memref<4x32xf32, #tpu.memory_space<vmem>>, vector<4x32xf32>
    %cst = arith.constant dense<0.000000e+00> : vector<128x32xf32>
    %6 = tpu.matmul %4, %5, %cst {dimension_numbers = #tpu.dot_dimension_numbers<[0], [0], [1], [1], [0, 1, 1, 1], [], []>, precision = #tpu.contract_precision<fp32>} : vector<4x128xf32>, vector<4x32xf32>, vector<128x32xf32> -> vector<128x32xf32>
    %c0_5 = arith.constant 0 : index
    %c0_6 = arith.constant 0 : index
    %7 = vector.load %arg4[%c0_5, %c0_6] : memref<1x32xf32, #tpu.memory_space<vmem>>, vector<1x32xf32>
    %8 = vector.broadcast %7 : vector<1x32xf32> to vector<128x32xf32>
    %9 = arith.addf %6, %8 : vector<128x32xf32>
    %cst_7 = arith.constant 0.000000e+00 : f32
    %10 = vector.broadcast %cst_7 : f32 to vector<128x32xf32>
    %11 = arith.maximumf %9, %10 : vector<128x32xf32>
    %c0_8 = arith.constant 0 : index
    %c0_9 = arith.constant 0 : index
    %12 = vector.load %arg8[%c0_8, %c0_9] : memref<1x32xf32, #tpu.memory_space<vmem>>, vector<1x32xf32>
    %cst_10 = arith.constant dense<0.000000e+00> : vector<32xf32>
    %13 = vector.multi_reduction <add>, %11, %cst_10 [0] : vector<128x32xf32> to vector<32xf32>
    %14 = vector.shape_cast %13 : vector<32xf32> to vector<1x32xf32>
    %15 = arith.addf %12, %14 : vector<1x32xf32>
    %c0_11 = arith.constant 0 : index
    %c0_12 = arith.constant 0 : index
    %16 = vector.load %arg8[%c0_11, %c0_12] : memref<1x32xf32, #tpu.memory_space<vmem>>, vector<1x32xf32>
    tpu.vector_store %arg8[%c0_11, %c0_12], %15 {strides = array<i32>} : memref<1x32xf32, #tpu.memory_space<vmem>>, vector<1x32xf32>,
    %c1_i32 = arith.constant 1 : i32
    %17 = arith.cmpi eq, %arg1, %c1_i32 : i32
    %18 = arith.extui %17 : i1 to i32
    %c0_i32_13 = arith.constant 0 : i32
    %19 = arith.cmpi ne, %18, %c0_i32_13 : i32
    scf.if %19 {
      %c0_14 = arith.constant 0 : index
      %c0_15 = arith.constant 0 : index
      %20 = vector.load %arg8[%c0_14, %c0_15] : memref<1x32xf32, #tpu.memory_space<vmem>>, vector<1x32xf32>
      %cst_16 = arith.constant 3.906250e-03 : f32
      %21 = vector.broadcast %cst_16 : f32 to vector<1x32xf32>
      %22 = arith.mulf %20, %21 : vector<1x32xf32>
      %c0_17 = arith.constant 0 : index
      %c0_18 = arith.constant 0 : index
      %23 = vector.load %arg5[%c0_17, %c0_18] : memref<32x128xf32, #tpu.memory_space<vmem>>, vector<32x128xf32>
      %cst_19 = arith.constant dense<0.000000e+00> : vector<1x128xf32>
      %24 = tpu.matmul %22, %23, %cst_19 {dimension_numbers = #tpu.dot_dimension_numbers<[1], [0], [0], [1], [0, 0, 1, 1], [], []>, precision = #tpu.contract_precision<fp32>} : vector<1x32xf32>, vector<32x128xf32>, vector<1x128xf32> -> vector<1x128xf32>
      %c0_20 = arith.constant 0 : index
      %c0_21 = arith.constant 0 : index
      %25 = vector.load %arg6[%c0_20, %c0_21] : memref<1x128xf32, #tpu.memory_space<vmem>>, vector<1x128xf32>
      %26 = arith.addf %24, %25 : vector<1x128xf32>
      %27 = arith.index_cast %arg0 : i32 to index
      %c0_22 = arith.constant 0 : index
      %28 = vector.load %arg7[%27, %c0_22] : memref<2x128xf32, #tpu.memory_space<vmem>>, vector<1x128xf32>
      tpu.vector_store %arg7[%27, %c0_22], %26 {strides = array<i32>} : memref<2x128xf32, #tpu.memory_space<vmem>>, vector<1x128xf32>,
    } else {
    }
    return
  }
  func.func @transform_0(%arg0: i32, %arg1: i32) -> (i32, i32, i32) {
    %c0_i32 = arith.constant 0 : i32
    %c0_i32_0 = arith.constant 0 : i32
    return %arg0, %c0_i32, %arg1 : i32, i32, i32
  }
  func.func @transform_1(%arg0: i32, %arg1: i32) -> (i32, i32) {
    %c0_i32 = arith.constant 0 : i32
    %c0_i32_0 = arith.constant 0 : i32
    %c0_i32_1 = arith.constant 0 : i32
    return %c0_i32, %c0_i32_0 : i32, i32
  }
  func.func @transform_2(%arg0: i32, %arg1: i32) -> (i32, i32) {
    %c0_i32 = arith.constant 0 : i32
    %c0_i32_0 = arith.constant 0 : i32
    %c0_i32_1 = arith.constant 0 : i32
    return %c0_i32, %c0_i32_0 : i32, i32
  }
  func.func @transform_3(%arg0: i32, %arg1: i32) -> (i32, i32) {
    %c0_i32 = arith.constant 0 : i32
    %c0_i32_0 = arith.constant 0 : i32
    %c0_i32_1 = arith.constant 0 : i32
    return %c0_i32, %c0_i32_0 : i32, i32
  }
  func.func @transform_4(%arg0: i32, %arg1: i32) -> (i32, i32) {
    %c0_i32 = arith.constant 0 : i32
    %c0_i32_0 = arith.constant 0 : i32
    %c0_i32_1 = arith.constant 0 : i32
    return %c0_i32, %c0_i32_0 : i32, i32
  }
  func.func @transform_5(%arg0: i32, %arg1: i32) -> (i32, i32) {
    %c0_i32 = arith.constant 0 : i32
    %c0_i32_0 = arith.constant 0 : i32
    %c0_i32_1 = arith.constant 0 : i32
    return %c0_i32, %c0_i32_0 : i32, i32
  }
}

</mosaic_0001>

<llo_original>
// kernel: tpu_custom_call.1
$region0: #{tpu_custom_call.1}
  #allocation0 [shape = 'u32[]', space=smem, size = 0x4, offset = 0x4, fixed_abs, tag = 'smem constant byte address 0x4 - core index']
  #allocation1 [shape = 'u32[72,128]{1,0:T(1,128)}', space=vmem, size = 0x9000, scoped, tag = 'internal scratch']
  #allocation2 [shape = 'f32[1,32]{1,0:T(1,128)}', space=vmem, size = 0x200, scoped, tag = 'scratch operand']
  %s0 = inlined_call_operand.hbm [shape: f32[2,4,256], index: 0, kind: input, shape index: {}]
  %s1 = inlined_call_operand.hbm [shape: f32[4,32], index: 1, kind: input, shape index: {}]
  %s2 = inlined_call_operand.vmem [shape: f32[1,32], index: 2, kind: input, shape index: {}]
  %s3 = inlined_call_operand.hbm [shape: f32[32,128], index: 3, kind: input, shape index: {}]
  %s4 = inlined_call_operand.vmem [shape: f32[1,128], index: 4, kind: input, shape index: {}]
  %s5 = inlined_call_operand.hbm [shape: f32[2,128], index: 5, kind: output, shape index: {}]
  %s6 = sld [smem:[#allocation0]]
  $region73: #{tpu_custom_call.1} parent=0
    _
  %s8 = ssub.s32 1, %s6
  %s9 = scalar_select 0, %s8, %s6
  $region1: #{tpu_custom_call.1} parent=0
    #allocation3 [shape = 'u8[4096]{0}', space=vmem, size = 0x1000, scoped, tag = 'input window, operand 0']
    #allocation4 [shape = 's32[2]{0}', space=sflag, size = 0x8, scoped, tag = 'scoped memory for tpu_custom_call.1']
    #allocation5 [shape = 's32[2]{0}', space=sflag, size = 0x8, scoped, tag = 'scoped memory for tpu_custom_call.1']
    #allocation6 [shape = 'u8[2048]{0}', space=vmem, size = 0x800, scoped, tag = 'input window, operand 1, single buffered']
    #allocation7 [shape = 's32[1]{0}', space=sflag, size = 0x4, scoped, tag = 'scoped memory for tpu_custom_call.1']
    #allocation8 [shape = 'u8[16384]{0}', space=vmem, size = 0x4000, scoped, tag = 'input window, operand 3, single buffered']
    #allocation9 [shape = 'u8[1024]{0}', space=vmem, size = 0x400, scoped, tag = 'output window, operand 0, single buffered']
    %10 = vsyncpa [#allocation4], 0
    %s11 = scalar_lea.sflag [#allocation4], 1
    %12 = vsyncpa %s11, 0
    %13 = vsyncpa [#allocation7], 0
    %14 = vsyncpa [#allocation5], 0
    loop: start=0, step=1, limit=6
    $region2: #{tpu_custom_call.1} parent=1 // loop_pre_header
      _
    $region3: #{tpu_custom_call.1} parent=1 // loop_header
      %s16 = sphi 0, %s20
      %p17 = scmp.ge.s32.totalorder %s16, 6
      %s23 = sphi 0, %s35
      %s24 = sphi 0, %s31
      %s25 = sphi 0, %s23
      %s26 = sphi 0, %s24
      %s27 = sphi 0, %s25
      %s28 = sphi 0, %s26
      %s40 = sphi 0, %s42
      %s43 = sphi 0, %s40
      %s44 = sphi 0, %s43
      %s60 = sphi 0, %s44
      %s64 = sphi 0, %s64
      %s66 = sphi 0, %s64
      %s67 = sphi 0, %s66
      %s81 = sphi 0, %s67
      %s85 = sphi 0, %s85
      %s87 = sphi 0, %s85
      %s88 = sphi 0, %s87
      %s102 = sphi 0, %s88
      %s106 = sphi 0, %s106
      %s108 = sphi 0, %s106
      %s109 = sphi 0, %s108
      %s123 = sphi 0, %s109
      %s127 = sphi 0, %s127
      %s129 = sphi 0, %s127
      %s130 = sphi 0, %s129
      %s144 = sphi 0, %s130
      %s148 = sphi 0, %s148
      %s150 = sphi 0, %s148
      %s151 = sphi 0, %s150
      %s165 = sphi 0, %s151
    $region4: #{tpu_custom_call.1} parent=1 // loop_header_branch
      %19 = sbr.rel (%p17) target = $region8
    $region5: #{tpu_custom_call.1} parent=1 // loop_body
      %s21 = ssub.s32 %s16, 1
      %s22 = ssub.s32 %s16, 2
      %s29 = sadd.s32 1, %s24
      %p30 = scmp.ge.s32.totalorder %s29, 2
      %s31 = scalar_select %p30, 0, %s29
      %s32 = sadd.s32 1, %s23
      %s33 = scalar_select %p30, %s32, %s23
      %p34 = scmp.ge.s32.totalorder %s33, 2
      %s35 = scalar_select %p34, 0, %s33
      %s36 = ssub.s32 %s23, %s35
      %s37 = ssub.s32 %s24, %s31
      %s38 = sor.u32 %s36, %s37
      %p39 = scmp.eq.s32.totalorder %s38, 0
      %s41 = sadd.s32 %s40, 1
      %s42 = scalar_select %p39, %s40, %s41
      %p45 = pneg %p39
      %p46 = scmp.eq.s32.totalorder %s16, 3
      %p47 = por %p45, %p46
      %p48 = scmp.ne.s32.totalorder %s40, %s43
      %p49 = scmp.eq.s32.totalorder %s16, 0
      %p50 = por %p48, %p49
      %p51 = scmp.ne.s32.totalorder %s40, %s43
      %p52 = scmp.eq.s32.totalorder %s21, 3
      %p53 = por %p51, %p52
      %p54 = scmp.ne.s32.totalorder %s43, %s44
      %p55 = scmp.eq.s32.totalorder %s21, 0
      %p56 = por %p54, %p55
      %p57 = scmp.ne.s32.totalorder %s43, %s44
      %p58 = scmp.eq.s32.totalorder %s22, 3
      %p59 = por %p57, %p58
      %p61 = scmp.ne.s32.totalorder %s44, %s60
      %p62 = scmp.eq.s32.totalorder %s22, 0
      %p63 = por %p61, %p62
      %s65 = sadd.s32 %s64, 1
      %p68 = scmp.eq.s32.totalorder %s16, 3
      %p69 = scmp.ne.s32.totalorder %s64, %s66
      %p70 = scmp.eq.s32.totalorder %s16, 0
      %p71 = por %p69, %p70
      %p72 = scmp.ne.s32.totalorder %s64, %s66
      %p73 = scmp.eq.s32.totalorder %s21, 3
      %p74 = por %p72, %p73
      %p75 = scmp.ne.s32.totalorder %s66, %s67
      %p76 = scmp.eq.s32.totalorder %s21, 0
      %p77 = por %p75, %p76
      %p78 = scmp.ne.s32.totalorder %s66, %s67
      %p79 = scmp.eq.s32.totalorder %s22, 3
      %p80 = por %p78, %p79
      %p82 = scmp.ne.s32.totalorder %s67, %s81
      %p83 = scmp.eq.s32.totalorder %s22, 0
      %p84 = por %p82, %p83
      %s86 = sadd.s32 %s85, 1
      %p89 = scmp.eq.s32.totalorder %s16, 3
      %p90 = scmp.ne.s32.totalorder %s85, %s87
      %p91 = scmp.eq.s32.totalorder %s16, 0
      %p92 = por %p90, %p91
      %p93 = scmp.ne.s32.totalorder %s85, %s87
      %p94 = scmp.eq.s32.totalorder %s21, 3
      %p95 = por %p93, %p94
      %p96 = scmp.ne.s32.totalorder %s87, %s88
      %p97 = scmp.eq.s32.totalorder %s21, 0
      %p98 = por %p96, %p97
      %p99 = scmp.ne.s32.totalorder %s87, %s88
      %p100 = scmp.eq.s32.totalorder %s22, 3
      %p101 = por %p99, %p100
      %p103 = scmp.ne.s32.totalorder %s88, %s102
      %p104 = scmp.eq.s32.totalorder %s22, 0
      %p105 = por %p103, %p104
      %s107 = sadd.s32 %s106, 1
      %p110 = scmp.eq.s32.totalorder %s16, 3
      %p111 = scmp.ne.s32.totalorder %s106, %s108
      %p112 = scmp.eq.s32.totalorder %s16, 0
      %p113 = por %p111, %p112
      %p114 = scmp.ne.s32.totalorder %s106, %s108
      %p115 = scmp.eq.s32.totalorder %s21, 3
      %p116 = por %p114, %p115
      %p117 = scmp.ne.s32.totalorder %s108, %s109
      %p118 = scmp.eq.s32.totalorder %s21, 0
      %p119 = por %p117, %p118
      %p120 = scmp.ne.s32.totalorder %s108, %s109
      %p121 = scmp.eq.s32.totalorder %s22, 3
      %p122 = por %p120, %p121
      %p124 = scmp.ne.s32.totalorder %s109, %s123
      %p125 = scmp.eq.s32.totalorder %s22, 0
      %p126 = por %p124, %p125
      %s128 = sadd.s32 %s127, 1
      %p131 = scmp.eq.s32.totalorder %s16, 3
      %p132 = scmp.ne.s32.totalorder %s127, %s129
      %p133 = scmp.eq.s32.totalorder %s16, 0
      %p134 = por %p132, %p133
      %p135 = scmp.ne.s32.totalorder %s127, %s129
      %p136 = scmp.eq.s32.totalorder %s21, 3
      %p137 = por %p135, %p136
      %p138 = scmp.ne.s32.totalorder %s129, %s130
      %p139 = scmp.eq.s32.totalorder %s21, 0
      %p140 = por %p138, %p139
      %p141 = scmp.ne.s32.totalorder %s129, %s130
      %p142 = scmp.eq.s32.totalorder %s22, 3
      %p143 = por %p141, %p142
      %p145 = scmp.ne.s32.totalorder %s130, %s144
      %p146 = scmp.eq.s32.totalorder %s22, 0
      %p147 = por %p145, %p146
      %s149 = sadd.s32 %s148, 1
      %p152 = scmp.eq.s32.totalorder %s16, 3
      %p153 = scmp.ne.s32.totalorder %s148, %s150
      %p154 = scmp.eq.s32.totalorder %s16, 0
      %p155 = por %p153, %p154
      %p156 = scmp.ne.s32.totalorder %s148, %s150
      %p157 = scmp.eq.s32.totalorder %s21, 3
      %p158 = por %p156, %p157
      %p159 = scmp.ne.s32.totalorder %s150, %s151
      %p160 = scmp.eq.s32.totalorder %s21, 0
      %p161 = por %p159, %p160
      %p162 = scmp.ne.s32.totalorder %s150, %s151
      %p163 = scmp.eq.s32.totalorder %s22, 3
      %p164 = por %p162, %p163
      %p166 = scmp.ne.s32.totalorder %s151, %s165
      %p167 = scmp.eq.s32.totalorder %s22, 0
      %p168 = por %p166, %p167
      %p169 = scmp.le.s32.totalorder 1, %s16
      %p170 = scmp.lt.s32.totalorder %s16, 5
      %p171 = pnand %p169, %p170
      %p172 = pneg %p171
      // Predicated region
      $region9: #{tpu_custom_call.1} parent=5 // pred_check
        _
      $region10: #{tpu_custom_call.1} parent=5 // pred_check_branch
        %174 = sbr.rel (%p171) target = $region12
      $region11: #{tpu_custom_call.1} parent=5 // pred_region
        %s175 = ssub.s32 %s16, 1
        // Predicated region
        $region13: #{tpu_custom_call.1} parent=11 // pred_check
          %p176 = pneg %p77
        $region14: #{tpu_custom_call.1} parent=11 // pred_check_branch
          %178 = sbr.rel (%p176) target = $region16
        $region15: #{tpu_custom_call.1} parent=11 // pred_region
          %180 = vsyncadd [#allocation7], 0
          %s182 = sshll.u32 %s1, 4
          %s183 = int_to_ptr.hbm [resolvable:$true] %s182
          %s184 = sshll.u32 [#allocation6], 4
          %s185 = int_to_ptr.vmem [resolvable:$true] %s184
          %187 = dma.hbm_to_vmem [thread:$0]  %s183, 64, %s185, [#allocation7]
        $region16: #{tpu_custom_call.1} parent=11 // pred_fallthru
          _
        // Predicated region
        $region17: #{tpu_custom_call.1} parent=11 // pred_check
          %p188 = pneg %p98
        $region18: #{tpu_custom_call.1} parent=11 // pred_check_branch
          %190 = sbr.rel (%p188) target = $region20
        $region19: #{tpu_custom_call.1} parent=11 // pred_region
          _
        $region20: #{tpu_custom_call.1} parent=11 // pred_fallthru
          _
        // Predicated region
        $region21: #{tpu_custom_call.1} parent=11 // pred_check
          %p191 = pneg %p119
        $region22: #{tpu_custom_call.1} parent=11 // pred_check_branch
          %193 = sbr.rel (%p191) target = $region24
        $region23: #{tpu_custom_call.1} parent=11 // pred_region
          %195 = vsyncadd [#allocation7], 0
          %s196 = sshll.u32 %s3, 4
          %s197 = int_to_ptr.hbm [resolvable:$true] %s196
          %s198 = sshll.u32 [#allocation8], 4
          %s199 = int_to_ptr.vmem [resolvable:$true] %s198
          %204 = dma.hbm_to_vmem [thread:$0]  %s197, 512, %s199, [#allocation7], 128, 128, 8
        $region24: #{tpu_custom_call.1} parent=11 // pred_fallthru
          _
        // Predicated region
        $region25: #{tpu_custom_call.1} parent=11 // pred_check
          %p205 = pneg %p140
        $region26: #{tpu_custom_call.1} parent=11 // pred_check_branch
          %207 = sbr.rel (%p205) target = $region28
        $region27: #{tpu_custom_call.1} parent=11 // pred_region
          _
        $region28: #{tpu_custom_call.1} parent=11 // pred_fallthru
          _
      $region12: #{tpu_custom_call.1} parent=5 // pred_fallthru
        _
      %p208 = scmp.lt.s32.totalorder %s16, 4
      // Predicated region
      $region29: #{tpu_custom_call.1} parent=5 // pred_check
        %p209 = pneg %p208
      $region30: #{tpu_custom_call.1} parent=5 // pred_check_branch
        %211 = sbr.rel (%p209) target = $region32
      $region31: #{tpu_custom_call.1} parent=5 // pred_region
        // Predicated region
        $region33: #{tpu_custom_call.1} parent=31 // pred_check
          %p212 = pneg %p50
        $region34: #{tpu_custom_call.1} parent=31 // pred_check_branch
          %214 = sbr.rel (%p212) target = $region36
        $region35: #{tpu_custom_call.1} parent=31 // pred_region
          %s215 = sand.u32 %s40, 1
          %s216 = scalar_lea.sflag [#allocation4], %s215
          %s217 = sand.u32 %s40, 1
          %s218 = smul.addr %s217, 4
          %s219 = scalar_lea.vmem [#allocation3], %s218
          %221 = vsyncadd %s216, 0
          %s222 = smul.addr %s23, 2
          %s223 = sadd.s32 %s24, %s222
          %s224 = smul.addr %s223, 4
          %s225 = scalar_lea.hbm %s0, %s224
          %s227 = sshll.u32 %s225, 4
          %s228 = int_to_ptr.hbm [resolvable:$true] %s227
          %s229 = sshll.u32 %s219, 4
          %s230 = int_to_ptr.vmem [resolvable:$true] %s229
          %232 = dma.hbm_to_vmem [thread:$0]  %s228, 64, %s230, %s216
        $region36: #{tpu_custom_call.1} parent=31 // pred_fallthru
          _
      $region32: #{tpu_custom_call.1} parent=5 // pred_fallthru
        _
      %p233 = scmp.le.s32.totalorder 1, %s16
      %p234 = scmp.lt.s32.totalorder %s16, 5
      %p235 = pnand %p233, %p234
      %p236 = pneg %p235
      // Predicated region
      $region37: #{tpu_custom_call.1} parent=5 // pred_check
        _
      $region38: #{tpu_custom_call.1} parent=5 // pred_check_branch
        %238 = sbr.rel (%p235) target = $region40
      $region39: #{tpu_custom_call.1} parent=5 // pred_region
        %s239 = ssub.s32 %s16, 1
        %s240 = sand.u32 %s43, 1
        %s241 = scalar_lea.sflag [#allocation4], %s240
        %s242 = sand.u32 %s43, 1
        %s243 = smul.addr %s242, 4
        %s244 = scalar_lea.vmem [#allocation3], %s243
        // Predicated region
        $region41: #{tpu_custom_call.1} parent=39 // pred_check
          %p245 = pneg %p56
        $region42: #{tpu_custom_call.1} parent=39 // pred_check_branch
          %247 = sbr.rel (%p245) target = $region44
        $region43: #{tpu_custom_call.1} parent=39 // pred_region
          %249 = dma.done %s241, 64
        $region44: #{tpu_custom_call.1} parent=39 // pred_fallthru
          _
        // Predicated region
        $region45: #{tpu_custom_call.1} parent=39 // pred_check
          %p250 = pneg %p77
        $region46: #{tpu_custom_call.1} parent=39 // pred_check_branch
          %252 = sbr.rel (%p250) target = $region48
        $region47: #{tpu_custom_call.1} parent=39 // pred_region
          %254 = dma.done [#allocation7], 64
        $region48: #{tpu_custom_call.1} parent=39 // pred_fallthru
          _
        // Predicated region
        $region49: #{tpu_custom_call.1} parent=39 // pred_check
          %p255 = pneg %p119
        $region50: #{tpu_custom_call.1} parent=39 // pred_check_branch
          %257 = sbr.rel (%p255) target = $region52
        $region51: #{tpu_custom_call.1} parent=39 // pred_region
          %259 = dma.done [#allocation7], 512
        $region52: #{tpu_custom_call.1} parent=39 // pred_fallthru
          _
        %s260 = sand.u32 %s43, 1
        %s261 = scalar_lea.sflag [#allocation4], %s260
        %s262 = sand.u32 %s43, 1
        %s263 = smul.addr %s262, 4
        %s264 = scalar_lea.vmem [#allocation3], %s263
        %p265 = pneg %p56
        %p266 = pneg %p53
        %p267 = pneg %p77
        %p268 = pneg %p74
        %p269 = pneg %p98
        %p270 = pneg %p95
        %p271 = pneg %p119
        %p272 = pneg %p116
        %p273 = pneg %p140
        %p274 = pneg %p137
        %p275 = pneg %p161
        %p276 = pneg %p158
        %p277 = scmp.eq.s32.totalorder %s26, 0
        // Predicated region
        $region53: #{tpu_custom_call.1} parent=39 // pred_check
          %p278 = pneg %p277
        $region54: #{tpu_custom_call.1} parent=39 // pred_check_branch
          %280 = sbr.rel (%p278) target = $region56
        $region55: #{tpu_custom_call.1} parent=39 // pred_region
          %vm281 = vcmask 253952
          %282 = vst.msk [vmem:[#allocation2] sm:$0x1] %vm281, 0.0
        $region56: #{tpu_custom_call.1} parent=39 // pred_fallthru
          _
        %v283 = vld [vmem:[%s244] sm:$0xf]
        %v284 = vld [vmem:[#allocation6] sm:$0xf]
        %v285 = vld [vmem:[%s2] sm:$0x1]
        %v287 = vperm.slane %v285, 0
        %289 = vxpose.xlu0.b32.start [1/16] %v283, 128
        %290 = vxpose.xlu0.b32.cont [2/16] 0.0, 128
        %291 = vxpose.xlu0.b32.cont [3/16] 0.0, 128
        %292 = vxpose.xlu0.b32.cont [4/16] 0.0, 128
        %293 = vxpose.xlu0.b32.cont [5/16] 0.0, 128
        %294 = vxpose.xlu0.b32.cont [6/16] 0.0, 128
        %295 = vxpose.xlu0.b32.cont [7/16] 0.0, 128
        %296 = vxpose.xlu0.b32.cont [8/16] 0.0, 128
        %297 = vxpose.xlu0.b32.cont [9/16] 0.0, 128
        %298 = vxpose.xlu0.b32.cont [10/16] 0.0, 128
        %299 = vxpose.xlu0.b32.cont [11/16] 0.0, 128
        %300 = vxpose.xlu0.b32.cont [12/16] 0.0, 128
        %301 = vxpose.xlu0.b32.cont [13/16] 0.0, 128
        %302 = vxpose.xlu0.b32.cont [14/16] 0.0, 128
        %303 = vxpose.xlu0.b32.cont [15/16] 0.0, 128
        %304 = vxpose.xlu0.b32.end [16/16] 0.0, 128
        %v305 = vpop.trf.xlu0
        %v306 = vpop.trf.xlu0
        %v307 = vpop.trf.xlu0
        %v308 = vpop.trf.xlu0
        %v309 = vpop.trf.xlu0
        %v310 = vpop.trf.xlu0
        %v311 = vpop.trf.xlu0
        %v312 = vpop.trf.xlu0
        %v313 = vpop.trf.xlu0
        %v314 = vpop.trf.xlu0
        %v315 = vpop.trf.xlu0
        %v316 = vpop.trf.xlu0
        %v317 = vpop.trf.xlu0
        %v318 = vpop.trf.xlu0
        %v319 = vpop.trf.xlu0
        %v320 = vpop.trf.xlu0
        %vm321 = vcmask 31744
        %v323 = vsel %vm321, %v305, 0
        %v326 = vsel %vm321, %v306, 0
        %v329 = vsel %vm321, %v307, 0
        %v332 = vsel %vm321, %v308, 0
        %v335 = vsel %vm321, %v309, 0
        %v338 = vsel %vm321, %v310, 0
        %v341 = vsel %vm321, %v311, 0
        %v344 = vsel %vm321, %v312, 0
        %v347 = vsel %vm321, %v313, 0
        %v350 = vsel %vm321, %v314, 0
        %v353 = vsel %vm321, %v315, 0
        %v356 = vsel %vm321, %v316, 0
        %v359 = vsel %vm321, %v317, 0
        %v362 = vsel %vm321, %v318, 0
        %v365 = vsel %vm321, %v319, 0
        %v368 = vsel %vm321, %v320, 0
        %vm370 = vcmask 1043456
        %v372 = vsel %vm370, %v284, 0
        %374 = vmatpush.msra.mxu0 0.0
        %375 = vmatpush.msra.mxu0 0.0
        %376 = vmatpush.msra.mxu0 0.0
        %377 = vmatpush.msra.mxu0 0.0
        %378 = vmatpush.msra.mxu0 0.0
        %379 = vmatpush.msra.mxu0 0.0
        %380 = vmatpush.msra.mxu0 0.0
        %381 = vmatpush.msra.mxu0 0.0
        %382 = vmatpush.msra.mxu0 0.0
        %383 = vmatpush.msra.mxu0 0.0
        %384 = vmatpush.msra.mxu0 0.0
        %385 = vmatpush.msra.mxu0 0.0
        %386 = vmatpush.msra.mxu0 0.0
        %387 = vmatpush.msra.mxu0 0.0
        %388 = vmatpush.msra.mxu0 0.0
        %v389 = vand.u32 %v372, 4294901760
        %390 = vmatpush.msra.mxu0 %v389
        %v391 = vand.u32 %v323, 4294901760
        %v392 = vsub.f32 %v323, %v391
        %v393 = vand.u32 %v392, 4294901760
        %v394 = vsub.f32 %v392, %v393
        %v395 = vand.u32 %v394, 4294901760
        %396 = vmatmul.f32.gmra.mxu0 %v395
        %v397 = vpop.f32.mrf.mxu0
        %v398 = vadd.f32 %v287, %v397
        %v399 = vand.u32 %v326, 4294901760
        %v400 = vsub.f32 %v326, %v399
        %v401 = vand.u32 %v400, 4294901760
        %v402 = vsub.f32 %v400, %v401
        %v403 = vand.u32 %v402, 4294901760
        %404 = vmatmul.f32.gmra.mxu0 %v403
        %v405 = vpop.f32.mrf.mxu0
        %v406 = vadd.f32 %v287, %v405
        %v407 = vand.u32 %v329, 4294901760
        %v408 = vsub.f32 %v329, %v407
        %v409 = vand.u32 %v408, 4294901760
        %v410 = vsub.f32 %v408, %v409
        %v411 = vand.u32 %v410, 4294901760
        %412 = vmatmul.f32.gmra.mxu0 %v411
        %v413 = vpop.f32.mrf.mxu0
        %v414 = vadd.f32 %v287, %v413
        %v415 = vand.u32 %v332, 4294901760
        %v416 = vsub.f32 %v332, %v415
        %v417 = vand.u32 %v416, 4294901760
        %v418 = vsub.f32 %v416, %v417
        %v419 = vand.u32 %v418, 4294901760
        %420 = vmatmul.f32.gmra.mxu0 %v419
        %v421 = vpop.f32.mrf.mxu0
        %v422 = vadd.f32 %v287, %v421
        %v423 = vand.u32 %v335, 4294901760
        %v424 = vsub.f32 %v335, %v423
        %v425 = vand.u32 %v424, 4294901760
        %v426 = vsub.f32 %v424, %v425
        %v427 = vand.u32 %v426, 4294901760
        %428 = vmatmul.f32.gmra.mxu0 %v427
        %v429 = vpop.f32.mrf.mxu0
        %v430 = vadd.f32 %v287, %v429
        %v431 = vand.u32 %v338, 4294901760
        %v432 = vsub.f32 %v338, %v431
        %v433 = vand.u32 %v432, 4294901760
        %v434 = vsub.f32 %v432, %v433
        %v435 = vand.u32 %v434, 4294901760
        %436 = vmatmul.f32.gmra.mxu0 %v435
        %v437 = vpop.f32.mrf.mxu0
        %v438 = vadd.f32 %v287, %v437
        %v439 = vand.u32 %v341, 4294901760
        %v440 = vsub.f32 %v341, %v439
        %v441 = vand.u32 %v440, 4294901760
        %v442 = vsub.f32 %v440, %v441
        %v443 = vand.u32 %v442, 4294901760
        %444 = vmatmul.f32.gmra.mxu0 %v443
        %v445 = vpop.f32.mrf.mxu0
        %v446 = vadd.f32 %v287, %v445
        %v447 = vand.u32 %v344, 4294901760
        %v448 = vsub.f32 %v344, %v447
        %v449 = vand.u32 %v448, 4294901760
        %v450 = vsub.f32 %v448, %v449
        %v451 = vand.u32 %v450, 4294901760
        %452 = vmatmul.f32.gmra.mxu0 %v451
        %v453 = vpop.f32.mrf.mxu0
        %v454 = vadd.f32 %v287, %v453
        %v455 = vand.u32 %v347, 4294901760
        %v456 = vsub.f32 %v347, %v455
        %v457 = vand.u32 %v456, 4294901760
        %v458 = vsub.f32 %v456, %v457
        %v459 = vand.u32 %v458, 4294901760
        %460 = vmatmul.f32.gmra.mxu0 %v459
        %v461 = vpop.f32.mrf.mxu0
        %v462 = vadd.f32 %v287, %v461
        %v463 = vand.u32 %v350, 4294901760
        %v464 = vsub.f32 %v350, %v463
        %v465 = vand.u32 %v464, 4294901760
        %v466 = vsub.f32 %v464, %v465
        %v467 = vand.u32 %v466, 4294901760
        %468 = vmatmul.f32.gmra.mxu0 %v467
        %v469 = vpop.f32.mrf.mxu0
        %v470 = vadd.f32 %v287, %v469
        %v471 = vand.u32 %v353, 4294901760
        %v472 = vsub.f32 %v353, %v471
        %v473 = vand.u32 %v472, 4294901760
        %v474 = vsub.f32 %v472, %v473
        %v475 = vand.u32 %v474, 4294901760
        %476 = vmatmul.f32.gmra.mxu0 %v475
        %v477 = vpop.f32.mrf.mxu0
        %v478 = vadd.f32 %v287, %v477
        %v479 = vand.u32 %v356, 4294901760
        %v480 = vsub.f32 %v356, %v479
        %v481 = vand.u32 %v480, 4294901760
        %v482 = vsub.f32 %v480, %v481
        %v483 = vand.u32 %v482, 4294901760
        %484 = vmatmul.f32.gmra.mxu0 %v483
        %v485 = vpop.f32.mrf.mxu0
        %v486 = vadd.f32 %v287, %v485
        %v487 = vand.u32 %v359, 4294901760
        %v488 = vsub.f32 %v359, %v487
        %v489 = vand.u32 %v488, 4294901760
        %v490 = vsub.f32 %v488, %v489
        %v491 = vand.u32 %v490, 4294901760
        %492 = vmatmul.f32.gmra.mxu0 %v491
        %v493 = vpop.f32.mrf.mxu0
        %v494 = vadd.f32 %v287, %v493
        %v495 = vand.u32 %v362, 4294901760
        %v496 = vsub.f32 %v362, %v495
        %v497 = vand.u32 %v496, 4294901760
        %v498 = vsub.f32 %v496, %v497
        %v499 = vand.u32 %v498, 4294901760
        %500 = vmatmul.f32.gmra.mxu0 %v499
        %v501 = vpop.f32.mrf.mxu0
        %v502 = vadd.f32 %v287, %v501
        %v503 = vand.u32 %v365, 4294901760
        %v504 = vsub.f32 %v365, %v503
        %v505 = vand.u32 %v504, 4294901760
        %v506 = vsub.f32 %v504, %v505
        %v507 = vand.u32 %v506, 4294901760
        %508 = vmatmul.f32.gmra.mxu0 %v507
        %v509 = vpop.f32.mrf.mxu0
        %v510 = vadd.f32 %v287, %v509
        %v511 = vand.u32 %v368, 4294901760
        %v512 = vsub.f32 %v368, %v511
        %v513 = vand.u32 %v512, 4294901760
        %v514 = vsub.f32 %v512, %v513
        %v515 = vand.u32 %v514, 4294901760
        %516 = vmatmul.f32.gmra.mxu0 %v515
        %v517 = vpop.f32.mrf.mxu0
        %v518 = vadd.f32 %v287, %v517
        %519 = vdwg.mxu0
        %520 = vmatpush.msra.mxu0 0.0
        %521 = vmatpush.msra.mxu0 0.0
        %522 = vmatpush.msra.mxu0 0.0
        %523 = vmatpush.msra.mxu0 0.0
        %524 = vmatpush.msra.mxu0 0.0
        %525 = vmatpush.msra.mxu0 0.0
        %526 = vmatpush.msra.mxu0 0.0
        %527 = vmatpush.msra.mxu0 0.0
        %528 = vmatpush.msra.mxu0 0.0
        %529 = vmatpush.msra.mxu0 0.0
        %530 = vmatpush.msra.mxu0 0.0
        %531 = vmatpush.msra.mxu0 0.0
        %532 = vmatpush.msra.mxu0 0.0
        %533 = vmatpush.msra.mxu0 0.0
        %534 = vmatpush.msra.mxu0 0.0
        %v535 = vand.u32 %v372, 4294901760
        %v536 = vsub.f32 %v372, %v535
        %v537 = vand.u32 %v536, 4294901760
        %v538 = vsub.f32 %v536, %v537
        %v539 = vand.u32 %v538, 4294901760
        %540 = vmatpush.msra.mxu0 %v539
        %v541 = vand.u32 %v323, 4294901760
        %542 = vmatmul.f32.gmra.mxu0 %v541
        %v543 = vpop.f32.mrf.mxu0
        %v544 = vadd.f32 %v398, %v543
        %v545 = vand.u32 %v326, 4294901760
        %546 = vmatmul.f32.gmra.mxu0 %v545
        %v547 = vpop.f32.mrf.mxu0
        %v548 = vadd.f32 %v406, %v547
        %v549 = vand.u32 %v329, 4294901760
        %550 = vmatmul.f32.gmra.mxu0 %v549
        %v551 = vpop.f32.mrf.mxu0
        %v552 = vadd.f32 %v414, %v551
        %v553 = vand.u32 %v332, 4294901760
        %554 = vmatmul.f32.gmra.mxu0 %v553
        %v555 = vpop.f32.mrf.mxu0
        %v556 = vadd.f32 %v422, %v555
        %v557 = vand.u32 %v335, 4294901760
        %558 = vmatmul.f32.gmra.mxu0 %v557
        %v559 = vpop.f32.mrf.mxu0
        %v560 = vadd.f32 %v430, %v559
        %v561 = vand.u32 %v338, 4294901760
        %562 = vmatmul.f32.gmra.mxu0 %v561
        %v563 = vpop.f32.mrf.mxu0
        %v564 = vadd.f32 %v438, %v563
        %v565 = vand.u32 %v341, 4294901760
        %566 = vmatmul.f32.gmra.mxu0 %v565
        %v567 = vpop.f32.mrf.mxu0
        %v568 = vadd.f32 %v446, %v567
        %v569 = vand.u32 %v344, 4294901760
        %570 = vmatmul.f32.gmra.mxu0 %v569
        %v571 = vpop.f32.mrf.mxu0
        %v572 = vadd.f32 %v454, %v571
        %v573 = vand.u32 %v347, 4294901760
        %574 = vmatmul.f32.gmra.mxu0 %v573
        %v575 = vpop.f32.mrf.mxu0
        %v576 = vadd.f32 %v462, %v575
        %v577 = vand.u32 %v350, 4294901760
        %578 = vmatmul.f32.gmra.mxu0 %v577
        %v579 = vpop.f32.mrf.mxu0
        %v580 = vadd.f32 %v470, %v579
        %v581 = vand.u32 %v353, 4294901760
        %582 = vmatmul.f32.gmra.mxu0 %v581
        %v583 = vpop.f32.mrf.mxu0
        %v584 = vadd.f32 %v478, %v583
        %v585 = vand.u32 %v356, 4294901760
        %586 = vmatmul.f32.gmra.mxu0 %v585
        %v587 = vpop.f32.mrf.mxu0
        %v588 = vadd.f32 %v486, %v587
        %v589 = vand.u32 %v359, 4294901760
        %590 = vmatmul.f32.gmra.mxu0 %v589
        %v591 = vpop.f32.mrf.mxu0
        %v592 = vadd.f32 %v494, %v591
        %v593 = vand.u32 %v362, 4294901760
        %594 = vmatmul.f32.gmra.mxu0 %v593
        %v595 = vpop.f32.mrf.mxu0
        %v596 = vadd.f32 %v502, %v595
        %v597 = vand.u32 %v365, 4294901760
        %598 = vmatmul.f32.gmra.mxu0 %v597
        %v599 = vpop.f32.mrf.mxu0
        %v600 = vadd.f32 %v510, %v599
        %v601 = vand.u32 %v368, 4294901760
        %602 = vmatmul.f32.gmra.mxu0 %v601
        %v603 = vpop.f32.mrf.mxu0
        %v604 = vadd.f32 %v518, %v603
        %605 = vdwg.mxu0
        %606 = vmatpush.msra.mxu0 0.0
        %607 = vmatpush.msra.mxu0 0.0
        %608 = vmatpush.msra.mxu0 0.0
        %609 = vmatpush.msra.mxu0 0.0
        %610 = vmatpush.msra.mxu0 0.0
        %611 = vmatpush.msra.mxu0 0.0
        %612 = vmatpush.msra.mxu0 0.0
        %613 = vmatpush.msra.mxu0 0.0
        %614 = vmatpush.msra.mxu0 0.0
        %615 = vmatpush.msra.mxu0 0.0
        %616 = vmatpush.msra.mxu0 0.0
        %617 = vmatpush.msra.mxu0 0.0
        %618 = vmatpush.msra.mxu0 0.0
        %619 = vmatpush.msra.mxu0 0.0
        %620 = vmatpush.msra.mxu0 0.0
        %v621 = vand.u32 %v372, 4294901760
        %v622 = vsub.f32 %v372, %v621
        %623 = vmatpush.msra.mxu0 %v622
        %v624 = vand.u32 %v323, 4294901760
        %v625 = vsub.f32 %v323, %v624
        %626 = vmatmul.f32.gmra.mxu0 %v625
        %v627 = vpop.f32.mrf.mxu0
        %v628 = vadd.f32 %v544, %v627
        %v629 = vand.u32 %v326, 4294901760
        %v630 = vsub.f32 %v326, %v629
        %631 = vmatmul.f32.gmra.mxu0 %v630
        %v632 = vpop.f32.mrf.mxu0
        %v633 = vadd.f32 %v548, %v632
        %v634 = vand.u32 %v329, 4294901760
        %v635 = vsub.f32 %v329, %v634
        %636 = vmatmul.f32.gmra.mxu0 %v635
        %v637 = vpop.f32.mrf.mxu0
        %v638 = vadd.f32 %v552, %v637
        %v639 = vand.u32 %v332, 4294901760
        %v640 = vsub.f32 %v332, %v639
        %641 = vmatmul.f32.gmra.mxu0 %v640
        %v642 = vpop.f32.mrf.mxu0
        %v643 = vadd.f32 %v556, %v642
        %v644 = vand.u32 %v335, 4294901760
        %v645 = vsub.f32 %v335, %v644
        %646 = vmatmul.f32.gmra.mxu0 %v645
        %v647 = vpop.f32.mrf.mxu0
        %v648 = vadd.f32 %v560, %v647
        %v649 = vand.u32 %v338, 4294901760
        %v650 = vsub.f32 %v338, %v649
        %651 = vmatmul.f32.gmra.mxu0 %v650
        %v652 = vpop.f32.mrf.mxu0
        %v653 = vadd.f32 %v564, %v652
        %v654 = vand.u32 %v341, 4294901760
        %v655 = vsub.f32 %v341, %v654
        %656 = vmatmul.f32.gmra.mxu0 %v655
        %v657 = vpop.f32.mrf.mxu0
        %v658 = vadd.f32 %v568, %v657
        %v659 = vand.u32 %v344, 4294901760
        %v660 = vsub.f32 %v344, %v659
        %661 = vmatmul.f32.gmra.mxu0 %v660
        %v662 = vpop.f32.mrf.mxu0
        %v663 = vadd.f32 %v572, %v662
        %v664 = vand.u32 %v347, 4294901760
        %v665 = vsub.f32 %v347, %v664
        %666 = vmatmul.f32.gmra.mxu0 %v665
        %v667 = vpop.f32.mrf.mxu0
        %v668 = vadd.f32 %v576, %v667
        %v669 = vand.u32 %v350, 4294901760
        %v670 = vsub.f32 %v350, %v669
        %671 = vmatmul.f32.gmra.mxu0 %v670
        %v672 = vpop.f32.mrf.mxu0
        %v673 = vadd.f32 %v580, %v672
        %v674 = vand.u32 %v353, 4294901760
        %v675 = vsub.f32 %v353, %v674
        %676 = vmatmul.f32.gmra.mxu0 %v675
        %v677 = vpop.f32.mrf.mxu0
        %v678 = vadd.f32 %v584, %v677
        %v679 = vand.u32 %v356, 4294901760
        %v680 = vsub.f32 %v356, %v679
        %681 = vmatmul.f32.gmra.mxu0 %v680
        %v682 = vpop.f32.mrf.mxu0
        %v683 = vadd.f32 %v588, %v682
        %v684 = vand.u32 %v359, 4294901760
        %v685 = vsub.f32 %v359, %v684
        %686 = vmatmul.f32.gmra.mxu0 %v685
        %v687 = vpop.f32.mrf.mxu0
        %v688 = vadd.f32 %v592, %v687
        %v689 = vand.u32 %v362, 4294901760
        %v690 = vsub.f32 %v362, %v689
        %691 = vmatmul.f32.gmra.mxu0 %v690
        %v692 = vpop.f32.mrf.mxu0
        %v693 = vadd.f32 %v596, %v692
        %v694 = vand.u32 %v365, 4294901760
        %v695 = vsub.f32 %v365, %v694
        %696 = vmatmul.f32.gmra.mxu0 %v695
        %v697 = vpop.f32.mrf.mxu0
        %v698 = vadd.f32 %v600, %v697
        %v699 = vand.u32 %v368, 4294901760
        %v700 = vsub.f32 %v368, %v699
        %701 = vmatmul.f32.gmra.mxu0 %v700
        %v702 = vpop.f32.mrf.mxu0
        %v703 = vadd.f32 %v604, %v702
        %704 = vdwg.mxu0
        %705 = vmatpush.msra.mxu0 0.0
        %706 = vmatpush.msra.mxu0 0.0
        %707 = vmatpush.msra.mxu0 0.0
        %708 = vmatpush.msra.mxu0 0.0
        %709 = vmatpush.msra.mxu0 0.0
        %710 = vmatpush.msra.mxu0 0.0
        %711 = vmatpush.msra.mxu0 0.0
        %712 = vmatpush.msra.mxu0 0.0
        %713 = vmatpush.msra.mxu0 0.0
        %714 = vmatpush.msra.mxu0 0.0
        %715 = vmatpush.msra.mxu0 0.0
        %716 = vmatpush.msra.mxu0 0.0
        %717 = vmatpush.msra.mxu0 0.0
        %718 = vmatpush.msra.mxu0 0.0
        %719 = vmatpush.msra.mxu0 0.0
        %v720 = vand.u32 %v372, 4294901760
        %721 = vmatpush.msra.mxu0 %v720
        %v722 = vand.u32 %v323, 4294901760
        %v723 = vsub.f32 %v323, %v722
        %v724 = vand.u32 %v723, 4294901760
        %725 = vmatmul.f32.gmra.mxu0 %v724
        %v726 = vpop.f32.mrf.mxu0
        %v727 = vadd.f32 %v628, %v726
        %v728 = vand.u32 %v326, 4294901760
        %v729 = vsub.f32 %v326, %v728
        %v730 = vand.u32 %v729, 4294901760
        %731 = vmatmul.f32.gmra.mxu0 %v730
        %v732 = vpop.f32.mrf.mxu0
        %v733 = vadd.f32 %v633, %v732
        %v734 = vand.u32 %v329, 4294901760
        %v735 = vsub.f32 %v329, %v734
        %v736 = vand.u32 %v735, 4294901760
        %737 = vmatmul.f32.gmra.mxu0 %v736
        %v738 = vpop.f32.mrf.mxu0
        %v739 = vadd.f32 %v638, %v738
        %v740 = vand.u32 %v332, 4294901760
        %v741 = vsub.f32 %v332, %v740
        %v742 = vand.u32 %v741, 4294901760
        %743 = vmatmul.f32.gmra.mxu0 %v742
        %v744 = vpop.f32.mrf.mxu0
        %v745 = vadd.f32 %v643, %v744
        %v746 = vand.u32 %v335, 4294901760
        %v747 = vsub.f32 %v335, %v746
        %v748 = vand.u32 %v747, 4294901760
        %749 = vmatmul.f32.gmra.mxu0 %v748
        %v750 = vpop.f32.mrf.mxu0
        %v751 = vadd.f32 %v648, %v750
        %v752 = vand.u32 %v338, 4294901760
        %v753 = vsub.f32 %v338, %v752
        %v754 = vand.u32 %v753, 4294901760
        %755 = vmatmul.f32.gmra.mxu0 %v754
        %v756 = vpop.f32.mrf.mxu0
        %v757 = vadd.f32 %v653, %v756
        %v758 = vand.u32 %v341, 4294901760
        %v759 = vsub.f32 %v341, %v758
        %v760 = vand.u32 %v759, 4294901760
        %761 = vmatmul.f32.gmra.mxu0 %v760
        %v762 = vpop.f32.mrf.mxu0
        %v763 = vadd.f32 %v658, %v762
        %v764 = vand.u32 %v344, 4294901760
        %v765 = vsub.f32 %v344, %v764
        %v766 = vand.u32 %v765, 4294901760
        %767 = vmatmul.f32.gmra.mxu0 %v766
        %v768 = vpop.f32.mrf.mxu0
        %v769 = vadd.f32 %v663, %v768
        %v770 = vand.u32 %v347, 4294901760
        %v771 = vsub.f32 %v347, %v770
        %v772 = vand.u32 %v771, 4294901760
        %773 = vmatmul.f32.gmra.mxu0 %v772
        %v774 = vpop.f32.mrf.mxu0
        %v775 = vadd.f32 %v668, %v774
        %v776 = vand.u32 %v350, 4294901760
        %v777 = vsub.f32 %v350, %v776
        %v778 = vand.u32 %v777, 4294901760
        %779 = vmatmul.f32.gmra.mxu0 %v778
        %v780 = vpop.f32.mrf.mxu0
        %v781 = vadd.f32 %v673, %v780
        %v782 = vand.u32 %v353, 4294901760
        %v783 = vsub.f32 %v353, %v782
        %v784 = vand.u32 %v783, 4294901760
        %785 = vmatmul.f32.gmra.mxu0 %v784
        %v786 = vpop.f32.mrf.mxu0
        %v787 = vadd.f32 %v678, %v786
        %v788 = vand.u32 %v356, 4294901760
        %v789 = vsub.f32 %v356, %v788
        %v790 = vand.u32 %v789, 4294901760
        %791 = vmatmul.f32.gmra.mxu0 %v790
        %v792 = vpop.f32.mrf.mxu0
        %v793 = vadd.f32 %v683, %v792
        %v794 = vand.u32 %v359, 4294901760
        %v795 = vsub.f32 %v359, %v794
        %v796 = vand.u32 %v795, 4294901760
        %797 = vmatmul.f32.gmra.mxu0 %v796
        %v798 = vpop.f32.mrf.mxu0
        %v799 = vadd.f32 %v688, %v798
        %v800 = vand.u32 %v362, 4294901760
        %v801 = vsub.f32 %v362, %v800
        %v802 = vand.u32 %v801, 4294901760
        %803 = vmatmul.f32.gmra.mxu0 %v802
        %v804 = vpop.f32.mrf.mxu0
        %v805 = vadd.f32 %v693, %v804
        %v806 = vand.u32 %v365, 4294901760
        %v807 = vsub.f32 %v365, %v806
        %v808 = vand.u32 %v807, 4294901760
        %809 = vmatmul.f32.gmra.mxu0 %v808
        %v810 = vpop.f32.mrf.mxu0
        %v811 = vadd.f32 %v698, %v810
        %v812 = vand.u32 %v368, 4294901760
        %v813 = vsub.f32 %v368, %v812
        %v814 = vand.u32 %v813, 4294901760
        %815 = vmatmul.f32.gmra.mxu0 %v814
        %v816 = vpop.f32.mrf.mxu0
        %v817 = vadd.f32 %v703, %v816
        %818 = vdwg.mxu0
        %819 = vmatpush.msra.mxu0 0.0
        %820 = vmatpush.msra.mxu0 0.0
        %821 = vmatpush.msra.mxu0 0.0
        %822 = vmatpush.msra.mxu0 0.0
        %823 = vmatpush.msra.mxu0 0.0
        %824 = vmatpush.msra.mxu0 0.0
        %825 = vmatpush.msra.mxu0 0.0
        %826 = vmatpush.msra.mxu0 0.0
        %827 = vmatpush.msra.mxu0 0.0
        %828 = vmatpush.msra.mxu0 0.0
        %829 = vmatpush.msra.mxu0 0.0
        %830 = vmatpush.msra.mxu0 0.0
        %831 = vmatpush.msra.mxu0 0.0
        %832 = vmatpush.msra.mxu0 0.0
        %833 = vmatpush.msra.mxu0 0.0
        %v834 = vand.u32 %v372, 4294901760
        %v835 = vsub.f32 %v372, %v834
        %v836 = vand.u32 %v835, 4294901760
        %837 = vmatpush.msra.mxu0 %v836
        %v838 = vand.u32 %v323, 4294901760
        %839 = vmatmul.f32.gmra.mxu0 %v838
        %v840 = vpop.f32.mrf.mxu0
        %v841 = vadd.f32 %v727, %v840
        %v842 = vand.u32 %v326, 4294901760
        %843 = vmatmul.f32.gmra.mxu0 %v842
        %v844 = vpop.f32.mrf.mxu0
        %v845 = vadd.f32 %v733, %v844
        %v846 = vand.u32 %v329, 4294901760
        %847 = vmatmul.f32.gmra.mxu0 %v846
        %v848 = vpop.f32.mrf.mxu0
        %v849 = vadd.f32 %v739, %v848
        %v850 = vand.u32 %v332, 4294901760
        %851 = vmatmul.f32.gmra.mxu0 %v850
        %v852 = vpop.f32.mrf.mxu0
        %v853 = vadd.f32 %v745, %v852
        %v854 = vand.u32 %v335, 4294901760
        %855 = vmatmul.f32.gmra.mxu0 %v854
        %v856 = vpop.f32.mrf.mxu0
        %v857 = vadd.f32 %v751, %v856
        %v858 = vand.u32 %v338, 4294901760
        %859 = vmatmul.f32.gmra.mxu0 %v858
        %v860 = vpop.f32.mrf.mxu0
        %v861 = vadd.f32 %v757, %v860
        %v862 = vand.u32 %v341, 4294901760
        %863 = vmatmul.f32.gmra.mxu0 %v862
        %v864 = vpop.f32.mrf.mxu0
        %v865 = vadd.f32 %v763, %v864
        %v866 = vand.u32 %v344, 4294901760
        %867 = vmatmul.f32.gmra.mxu0 %v866
        %v868 = vpop.f32.mrf.mxu0
        %v869 = vadd.f32 %v769, %v868
        %v870 = vand.u32 %v347, 4294901760
        %871 = vmatmul.f32.gmra.mxu0 %v870
        %v872 = vpop.f32.mrf.mxu0
        %v873 = vadd.f32 %v775, %v872
        %v874 = vand.u32 %v350, 4294901760
        %875 = vmatmul.f32.gmra.mxu0 %v874
        %v876 = vpop.f32.mrf.mxu0
        %v877 = vadd.f32 %v781, %v876
        %v878 = vand.u32 %v353, 4294901760
        %879 = vmatmul.f32.gmra.mxu0 %v878
        %v880 = vpop.f32.mrf.mxu0
        %v881 = vadd.f32 %v787, %v880
        %v882 = vand.u32 %v356, 4294901760
        %883 = vmatmul.f32.gmra.mxu0 %v882
        %v884 = vpop.f32.mrf.mxu0
        %v885 = vadd.f32 %v793, %v884
        %v886 = vand.u32 %v359, 4294901760
        %887 = vmatmul.f32.gmra.mxu0 %v886
        %v888 = vpop.f32.mrf.mxu0
        %v889 = vadd.f32 %v799, %v888
        %v890 = vand.u32 %v362, 4294901760
        %891 = vmatmul.f32.gmra.mxu0 %v890
        %v892 = vpop.f32.mrf.mxu0
        %v893 = vadd.f32 %v805, %v892
        %v894 = vand.u32 %v365, 4294901760
        %895 = vmatmul.f32.gmra.mxu0 %v894
        %v896 = vpop.f32.mrf.mxu0
        %v897 = vadd.f32 %v811, %v896
        %v898 = vand.u32 %v368, 4294901760
        %899 = vmatmul.f32.gmra.mxu0 %v898
        %v900 = vpop.f32.mrf.mxu0
        %v901 = vadd.f32 %v817, %v900
        %902 = vdwg.mxu0
        %903 = vmatpush.msra.mxu0 0.0
        %904 = vmatpush.msra.mxu0 0.0
        %905 = vmatpush.msra.mxu0 0.0
        %906 = vmatpush.msra.mxu0 0.0
        %907 = vmatpush.msra.mxu0 0.0
        %908 = vmatpush.msra.mxu0 0.0
        %909 = vmatpush.msra.mxu0 0.0
        %910 = vmatpush.msra.mxu0 0.0
        %911 = vmatpush.msra.mxu0 0.0
        %912 = vmatpush.msra.mxu0 0.0
        %913 = vmatpush.msra.mxu0 0.0
        %914 = vmatpush.msra.mxu0 0.0
        %915 = vmatpush.msra.mxu0 0.0
        %916 = vmatpush.msra.mxu0 0.0
        %917 = vmatpush.msra.mxu0 0.0
        %v918 = vand.u32 %v372, 4294901760
        %919 = vmatpush.msra.mxu0 %v918
        %v920 = vand.u32 %v323, 4294901760
        %921 = vmatmul.f32.gmra.mxu0 %v920
        %v922 = vpop.f32.mrf.mxu0
        %v923 = vadd.f32 %v841, %v922
        %v924 = vand.u32 %v326, 4294901760
        %925 = vmatmul.f32.gmra.mxu0 %v924
        %v926 = vpop.f32.mrf.mxu0
        %v927 = vadd.f32 %v845, %v926
        %v928 = vand.u32 %v329, 4294901760
        %929 = vmatmul.f32.gmra.mxu0 %v928
        %v930 = vpop.f32.mrf.mxu0
        %v931 = vadd.f32 %v849, %v930
        %v932 = vand.u32 %v332, 4294901760
        %933 = vmatmul.f32.gmra.mxu0 %v932
        %v934 = vpop.f32.mrf.mxu0
        %v935 = vadd.f32 %v853, %v934
        %v936 = vand.u32 %v335, 4294901760
        %937 = vmatmul.f32.gmra.mxu0 %v936
        %v938 = vpop.f32.mrf.mxu0
        %v939 = vadd.f32 %v857, %v938
        %v940 = vand.u32 %v338, 4294901760
        %941 = vmatmul.f32.gmra.mxu0 %v940
        %v942 = vpop.f32.mrf.mxu0
        %v943 = vadd.f32 %v861, %v942
        %v944 = vand.u32 %v341, 4294901760
        %945 = vmatmul.f32.gmra.mxu0 %v944
        %v946 = vpop.f32.mrf.mxu0
        %v947 = vadd.f32 %v865, %v946
        %v948 = vand.u32 %v344, 4294901760
        %949 = vmatmul.f32.gmra.mxu0 %v948
        %v950 = vpop.f32.mrf.mxu0
        %v951 = vadd.f32 %v869, %v950
        %v952 = vand.u32 %v347, 4294901760
        %953 = vmatmul.f32.gmra.mxu0 %v952
        %v954 = vpop.f32.mrf.mxu0
        %v955 = vadd.f32 %v873, %v954
        %v956 = vand.u32 %v350, 4294901760
        %957 = vmatmul.f32.gmra.mxu0 %v956
        %v958 = vpop.f32.mrf.mxu0
        %v959 = vadd.f32 %v877, %v958
        %v960 = vand.u32 %v353, 4294901760
        %961 = vmatmul.f32.gmra.mxu0 %v960
        %v962 = vpop.f32.mrf.mxu0
        %v963 = vadd.f32 %v881, %v962
        %v964 = vand.u32 %v356, 4294901760
        %965 = vmatmul.f32.gmra.mxu0 %v964
        %v966 = vpop.f32.mrf.mxu0
        %v967 = vadd.f32 %v885, %v966
        %v968 = vand.u32 %v359, 4294901760
        %969 = vmatmul.f32.gmra.mxu0 %v968
        %v970 = vpop.f32.mrf.mxu0
        %v971 = vadd.f32 %v889, %v970
        %v972 = vand.u32 %v362, 4294901760
        %973 = vmatmul.f32.gmra.mxu0 %v972
        %v974 = vpop.f32.mrf.mxu0
        %v975 = vadd.f32 %v893, %v974
        %v976 = vand.u32 %v365, 4294901760
        %977 = vmatmul.f32.gmra.mxu0 %v976
        %v978 = vpop.f32.mrf.mxu0
        %v979 = vadd.f32 %v897, %v978
        %v980 = vand.u32 %v368, 4294901760
        %981 = vmatmul.f32.gmra.mxu0 %v980
        %v982 = vpop.f32.mrf.mxu0
        %v983 = vadd.f32 %v901, %v982
        %984 = vdwg.mxu0
        %v985 = vmax.f32 %v923, 0.0
        %v986 = vmax.f32 %v927, 0.0
        %v987 = vmax.f32 %v931, 0.0
        %v988 = vmax.f32 %v935, 0.0
        %v989 = vmax.f32 %v939, 0.0
        %v990 = vmax.f32 %v943, 0.0
        %v991 = vmax.f32 %v947, 0.0
        %v992 = vmax.f32 %v951, 0.0
        %v993 = vmax.f32 %v955, 0.0
        %v994 = vmax.f32 %v959, 0.0
        %v995 = vmax.f32 %v963, 0.0
        %v996 = vmax.f32 %v967, 0.0
        %v997 = vmax.f32 %v971, 0.0
        %v998 = vmax.f32 %v975, 0.0
        %v999 = vmax.f32 %v979, 0.0
        %v1000 = vmax.f32 %v983, 0.0
        %v1001 = vld [vmem:[#allocation2] sm:$0x1]
        %vm1002 = vcmask 261120
        %v1003 = vsel %vm1002, %v985, 0.0
        %v1004 = vsel %vm1002, %v986, 0.0
        %v1005 = vadd.f32 %v1003, %v1004
        %v1006 = vsel %vm1002, %v987, 0.0
        %v1007 = vadd.f32 %v1005, %v1006
        %v1008 = vsel %vm1002, %v988, 0.0
        %v1009 = vadd.f32 %v1007, %v1008
        %v1010 = vsel %vm1002, %v989, 0.0
        %v1011 = vadd.f32 %v1009, %v1010
        %v1012 = vsel %vm1002, %v990, 0.0
        %v1013 = vadd.f32 %v1011, %v1012
        %v1014 = vsel %vm1002, %v991, 0.0
        %v1015 = vadd.f32 %v1013, %v1014
        %v1016 = vsel %vm1002, %v992, 0.0
        %v1017 = vadd.f32 %v1015, %v1016
        %v1018 = vsel %vm1002, %v993, 0.0
        %v1019 = vadd.f32 %v1017, %v1018
        %v1020 = vsel %vm1002, %v994, 0.0
        %v1021 = vadd.f32 %v1019, %v1020
        %v1022 = vsel %vm1002, %v995, 0.0
        %v1023 = vadd.f32 %v1021, %v1022
        %v1024 = vsel %vm1002, %v996, 0.0
        %v1025 = vadd.f32 %v1023, %v1024
        %v1026 = vsel %vm1002, %v997, 0.0
        %v1027 = vadd.f32 %v1025, %v1026
        %v1028 = vsel %vm1002, %v998, 0.0
        %v1029 = vadd.f32 %v1027, %v1028
        %v1030 = vsel %vm1002, %v999, 0.0
        %v1031 = vadd.f32 %v1029, %v1030
        %v1032 = vsel %vm1002, %v1000, 0.0
        %v1033 = vadd.f32 %v1031, %v1032
        %v1034 = vrot.slane %v1033, 4
        %v1035 = vadd.f32 %v1033, %v1034
        %v1036 = vrot.slane %v1035, 2
        %v1037 = vadd.f32 %v1035, %v1036
        %v1038 = vrot.slane %v1037, 1
        %v1039 = vadd.f32 %v1037, %v1038
        %v1040 = vadd.f32 %v1001, %v1039
        %vm1041 = vcmask 253952
        %1042 = vst.msk [vmem:[#allocation2] sm:$0x1] %vm1041, %v1040
        %p1043 = scmp.eq.s32.totalorder %s26, 1
        // Predicated region
        $region57: #{tpu_custom_call.1} parent=39 // pred_check
          %p1044 = pneg %p1043
        $region58: #{tpu_custom_call.1} parent=39 // pred_check_branch
          %1046 = sbr.rel (%p1044) target = $region60
        $region59: #{tpu_custom_call.1} parent=39 // pred_region
          %v1047 = vld [vmem:[#allocation2] sm:$0x1]
          %v1048 = vmul.f32 %v1047, 0.00390625
          %v1049 = vld [vmem:[#allocation8] sm:$0xff]
          %v1050 = vld [vmem:[#allocation8 + $0x8] sm:$0xff]
          %v1051 = vld [vmem:[#allocation8 + $0x10] sm:$0xff]
          %v1052 = vld [vmem:[#allocation8 + $0x18] sm:$0xff]
          %v1053 = vld [vmem:[%s4] sm:$0x1]
          %v1055 = vsel %vm1002, %v1048, 0
          %1057 = vmatpush.msra.mxu0 0.0
          %1058 = vmatpush.msra.mxu0 0.0
          %1059 = vmatpush.msra.mxu0 0.0
          %1060 = vmatpush.msra.mxu0 0.0
          %1061 = vmatpush.msra.mxu0 0.0
          %1062 = vmatpush.msra.mxu0 0.0
          %1063 = vmatpush.msra.mxu0 0.0
          %1064 = vmatpush.msra.mxu0 0.0
          %1065 = vmatpush.msra.mxu0 0.0
          %1066 = vmatpush.msra.mxu0 0.0
          %1067 = vmatpush.msra.mxu0 0.0
          %1068 = vmatpush.msra.mxu0 0.0
          %v1069 = vand.u32 %v1052, 4294901760
          %1070 = vmatpush.msra.mxu0 %v1069
          %v1071 = vand.u32 %v1051, 4294901760
          %1072 = vmatpush.msra.mxu0 %v1071
          %v1073 = vand.u32 %v1050, 4294901760
          %1074 = vmatpush.msra.mxu0 %v1073
          %v1075 = vand.u32 %v1049, 4294901760
          %1076 = vmatpush.msra.mxu0 %v1075
          %v1077 = vand.u32 %v1055, 4294901760
          %v1078 = vsub.f32 %v1055, %v1077
          %v1079 = vand.u32 %v1078, 4294901760
          %v1080 = vsub.f32 %v1078, %v1079
          %v1081 = vand.u32 %v1080, 4294901760
          %1082 = vmatmul.f32.gmra.mxu0 %v1081
          %v1083 = vpop.f32.mrf.mxu0
          %v1084 = vadd.f32 %v1053, %v1083
          %1085 = vdwg.mxu0
          %1086 = vmatpush.msra.mxu0 0.0
          %1087 = vmatpush.msra.mxu0 0.0
          %1088 = vmatpush.msra.mxu0 0.0
          %1089 = vmatpush.msra.mxu0 0.0
          %1090 = vmatpush.msra.mxu0 0.0
          %1091 = vmatpush.msra.mxu0 0.0
          %1092 = vmatpush.msra.mxu0 0.0
          %1093 = vmatpush.msra.mxu0 0.0
          %1094 = vmatpush.msra.mxu0 0.0
          %1095 = vmatpush.msra.mxu0 0.0
          %1096 = vmatpush.msra.mxu0 0.0
          %1097 = vmatpush.msra.mxu0 0.0
          %v1098 = vand.u32 %v1052, 4294901760
          %v1099 = vsub.f32 %v1052, %v1098
          %v1100 = vand.u32 %v1099, 4294901760
          %v1101 = vsub.f32 %v1099, %v1100
          %v1102 = vand.u32 %v1101, 4294901760
          %1103 = vmatpush.msra.mxu0 %v1102
          %v1104 = vand.u32 %v1051, 4294901760
          %v1105 = vsub.f32 %v1051, %v1104
          %v1106 = vand.u32 %v1105, 4294901760
          %v1107 = vsub.f32 %v1105, %v1106
          %v1108 = vand.u32 %v1107, 4294901760
          %1109 = vmatpush.msra.mxu0 %v1108
          %v1110 = vand.u32 %v1050, 4294901760
          %v1111 = vsub.f32 %v1050, %v1110
          %v1112 = vand.u32 %v1111, 4294901760
          %v1113 = vsub.f32 %v1111, %v1112
          %v1114 = vand.u32 %v1113, 4294901760
          %1115 = vmatpush.msra.mxu0 %v1114
          %v1116 = vand.u32 %v1049, 4294901760
          %v1117 = vsub.f32 %v1049, %v1116
          %v1118 = vand.u32 %v1117, 4294901760
          %v1119 = vsub.f32 %v1117, %v1118
          %v1120 = vand.u32 %v1119, 4294901760
          %1121 = vmatpush.msra.mxu0 %v1120
          %v1122 = vand.u32 %v1055, 4294901760
          %1123 = vmatmul.f32.gmra.mxu0 %v1122
          %v1124 = vpop.f32.mrf.mxu0
          %v1125 = vadd.f32 %v1084, %v1124
          %1126 = vdwg.mxu0
          %1127 = vmatpush.msra.mxu0 0.0
          %1128 = vmatpush.msra.mxu0 0.0
          %1129 = vmatpush.msra.mxu0 0.0
          %1130 = vmatpush.msra.mxu0 0.0
          %1131 = vmatpush.msra.mxu0 0.0
          %1132 = vmatpush.msra.mxu0 0.0
          %1133 = vmatpush.msra.mxu0 0.0
          %1134 = vmatpush.msra.mxu0 0.0
          %1135 = vmatpush.msra.mxu0 0.0
          %1136 = vmatpush.msra.mxu0 0.0
          %1137 = vmatpush.msra.mxu0 0.0
          %1138 = vmatpush.msra.mxu0 0.0
          %v1139 = vand.u32 %v1052, 4294901760
          %v1140 = vsub.f32 %v1052, %v1139
          %1141 = vmatpush.msra.mxu0 %v1140
          %v1142 = vand.u32 %v1051, 4294901760
          %v1143 = vsub.f32 %v1051, %v1142
          %1144 = vmatpush.msra.mxu0 %v1143
          %v1145 = vand.u32 %v1050, 4294901760
          %v1146 = vsub.f32 %v1050, %v1145
          %1147 = vmatpush.msra.mxu0 %v1146
          %v1148 = vand.u32 %v1049, 4294901760
          %v1149 = vsub.f32 %v1049, %v1148
          %1150 = vmatpush.msra.mxu0 %v1149
          %v1151 = vand.u32 %v1055, 4294901760
          %v1152 = vsub.f32 %v1055, %v1151
          %1153 = vmatmul.f32.gmra.mxu0 %v1152
          %v1154 = vpop.f32.mrf.mxu0
          %v1155 = vadd.f32 %v1125, %v1154
          %1156 = vdwg.mxu0
          %1157 = vmatpush.msra.mxu0 0.0
          %1158 = vmatpush.msra.mxu0 0.0
          %1159 = vmatpush.msra.mxu0 0.0
          %1160 = vmatpush.msra.mxu0 0.0
          %1161 = vmatpush.msra.mxu0 0.0
          %1162 = vmatpush.msra.mxu0 0.0
          %1163 = vmatpush.msra.mxu0 0.0
          %1164 = vmatpush.msra.mxu0 0.0
          %1165 = vmatpush.msra.mxu0 0.0
          %1166 = vmatpush.msra.mxu0 0.0
          %1167 = vmatpush.msra.mxu0 0.0
          %1168 = vmatpush.msra.mxu0 0.0
          %v1169 = vand.u32 %v1052, 4294901760
          %1170 = vmatpush.msra.mxu0 %v1169
          %v1171 = vand.u32 %v1051, 4294901760
          %1172 = vmatpush.msra.mxu0 %v1171
          %v1173 = vand.u32 %v1050, 4294901760
          %1174 = vmatpush.msra.mxu0 %v1173
          %v1175 = vand.u32 %v1049, 4294901760
          %1176 = vmatpush.msra.mxu0 %v1175
          %v1177 = vand.u32 %v1055, 4294901760
          %v1178 = vsub.f32 %v1055, %v1177
          %v1179 = vand.u32 %v1178, 4294901760
          %1180 = vmatmul.f32.gmra.mxu0 %v1179
          %v1181 = vpop.f32.mrf.mxu0
          %v1182 = vadd.f32 %v1155, %v1181
          %1183 = vdwg.mxu0
          %1184 = vmatpush.msra.mxu0 0.0
          %1185 = vmatpush.msra.mxu0 0.0
          %1186 = vmatpush.msra.mxu0 0.0
          %1187 = vmatpush.msra.mxu0 0.0
          %1188 = vmatpush.msra.mxu0 0.0
          %1189 = vmatpush.msra.mxu0 0.0
          %1190 = vmatpush.msra.mxu0 0.0
          %1191 = vmatpush.msra.mxu0 0.0
          %1192 = vmatpush.msra.mxu0 0.0
          %1193 = vmatpush.msra.mxu0 0.0
          %1194 = vmatpush.msra.mxu0 0.0
          %1195 = vmatpush.msra.mxu0 0.0
          %v1196 = vand.u32 %v1052, 4294901760
          %v1197 = vsub.f32 %v1052, %v1196
          %v1198 = vand.u32 %v1197, 4294901760
          %1199 = vmatpush.msra.mxu0 %v1198
          %v1200 = vand.u32 %v1051, 4294901760
          %v1201 = vsub.f32 %v1051, %v1200
          %v1202 = vand.u32 %v1201, 4294901760
          %1203 = vmatpush.msra.mxu0 %v1202
          %v1204 = vand.u32 %v1050, 4294901760
          %v1205 = vsub.f32 %v1050, %v1204
          %v1206 = vand.u32 %v1205, 4294901760
          %1207 = vmatpush.msra.mxu0 %v1206
          %v1208 = vand.u32 %v1049, 4294901760
          %v1209 = vsub.f32 %v1049, %v1208
          %v1210 = vand.u32 %v1209, 4294901760
          %1211 = vmatpush.msra.mxu0 %v1210
          %v1212 = vand.u32 %v1055, 4294901760
          %1213 = vmatmul.f32.gmra.mxu0 %v1212
          %v1214 = vpop.f32.mrf.mxu0
          %v1215 = vadd.f32 %v1182, %v1214
          %1216 = vdwg.mxu0
          %1217 = vmatpush.msra.mxu0 0.0
          %1218 = vmatpush.msra.mxu0 0.0
          %1219 = vmatpush.msra.mxu0 0.0
          %1220 = vmatpush.msra.mxu0 0.0
          %1221 = vmatpush.msra.mxu0 0.0
          %1222 = vmatpush.msra.mxu0 0.0
          %1223 = vmatpush.msra.mxu0 0.0
          %1224 = vmatpush.msra.mxu0 0.0
          %1225 = vmatpush.msra.mxu0 0.0
          %1226 = vmatpush.msra.mxu0 0.0
          %1227 = vmatpush.msra.mxu0 0.0
          %1228 = vmatpush.msra.mxu0 0.0
          %v1229 = vand.u32 %v1052, 4294901760
          %1230 = vmatpush.msra.mxu0 %v1229
          %v1231 = vand.u32 %v1051, 4294901760
          %1232 = vmatpush.msra.mxu0 %v1231
          %v1233 = vand.u32 %v1050, 4294901760
          %1234 = vmatpush.msra.mxu0 %v1233
          %v1235 = vand.u32 %v1049, 4294901760
          %1236 = vmatpush.msra.mxu0 %v1235
          %v1237 = vand.u32 %v1055, 4294901760
          %1238 = vmatmul.f32.gmra.mxu0 %v1237
          %v1239 = vpop.f32.mrf.mxu0
          %v1240 = vadd.f32 %v1215, %v1239
          %1241 = vdwg.mxu0
          %s1242 = scalar_lea.vmem [#allocation9], %s25
          %1243 = vst [vmem:[%s1242] sm:$0x1] %v1240
        $region60: #{tpu_custom_call.1} parent=39 // pred_fallthru
          _
        // Predicated region
        $region61: #{tpu_custom_call.1} parent=39 // pred_check
          %p1244 = pneg %p158
        $region62: #{tpu_custom_call.1} parent=39 // pred_check_branch
          %1246 = sbr.rel (%p1244) target = $region64
        $region63: #{tpu_custom_call.1} parent=39 // pred_region
          %1248 = vsyncadd [#allocation5], 0
          %s1250 = sshll.u32 [#allocation9], 4
          %s1251 = int_to_ptr.vmem [resolvable:$true] %s1250
          %s1252 = sshll.u32 %s5, 4
          %s1253 = int_to_ptr.hbm [resolvable:$true] %s1252
          %1255 = dma.vmem_to_hbm [thread:$0]  %s1251, 32, %s1253, [#allocation5]
        $region64: #{tpu_custom_call.1} parent=39 // pred_fallthru
          _
        // Predicated region
        $region65: #{tpu_custom_call.1} parent=39 // pred_check
          %p1256 = pneg %p158
        $region66: #{tpu_custom_call.1} parent=39 // pred_check_branch
          %1258 = sbr.rel (%p1256) target = $region68
        $region67: #{tpu_custom_call.1} parent=39 // pred_region
          %1260 = dma.done [#allocation5], 32
        $region68: #{tpu_custom_call.1} parent=39 // pred_fallthru
          _
      $region40: #{tpu_custom_call.1} parent=5 // pred_fallthru
        _
      %p1261 = scmp.le.s32.totalorder 2, %s16
      // Predicated region
      $region69: #{tpu_custom_call.1} parent=5 // pred_check
        %p1262 = pneg %p1261
      $region70: #{tpu_custom_call.1} parent=5 // pred_check_branch
        %1264 = sbr.rel (%p1262) target = $region72
      $region71: #{tpu_custom_call.1} parent=5 // pred_region
        %s1265 = ssub.s32 %s16, 2
      $region72: #{tpu_custom_call.1} parent=5 // pred_fallthru
        _
    $region6: #{tpu_custom_call.1} parent=1 // loop_footer
      %s20 = sadd.s32 1, %s16
    $region7: #{tpu_custom_call.1} parent=1 // loop_footer_branch
      %15 = sbr.rel target = $region3
    $region8: #{tpu_custom_call.1} parent=1 // loop_exit
      _
    %1266 = vsyncpa [#allocation4], 1
    %s1267 = scalar_lea.sflag [#allocation4], 1
    %1268 = vsyncpa %s1267, 1
    %1269 = vsyncpa [#allocation7], 1
    %1270 = vsyncpa [#allocation5], 1
    %s1271 = scalar_lea.sflag [#allocation5], 1
    %1272 = vsyncpa %s1271, 1

</llo_original>
